<compile_context>
chip_gen: v7x
topology: tpu7x:2x2x1
jax: 0.10.0
libtpu: 0.0.40
codegen_flags: <defaults>
</compile_context>

<pallas_src>
import jax
import jax.numpy as jnp
from jax.experimental import pallas as pl
from jax.experimental.pallas import tpu as pltpu

_NEG_INF = -1e30  # finite "minus infinity" for padded vocab lanes / running-max init


def _round_up(x, m):
    return (x + m - 1) // m * m


def _vmem_capacity_bytes():
    try:
        return int(pltpu.get_tpu_info().vmem_capacity_bytes)
    except Exception:
        return None


def _vmem_limit_bytes():
    cap = _vmem_capacity_bytes()
    # ~80% ceiling leaves compiler-internal scratch headroom (esp. on 64 MiB/TC v7x).
    return None if cap is None else int(cap * 0.8)


def _vmem_budget_bytes():
    cap = _vmem_capacity_bytes()
    return (24 << 20) if cap is None else int(cap * 0.65)


def _compiler_params(dimension_semantics):
    kwargs = dict(dimension_semantics=dimension_semantics)
    lim = _vmem_limit_bytes()
    if lim is not None:
        kwargs["vmem_limit_bytes"] = lim
    return pltpu.CompilerParams(**kwargs)


def _resident_bytes(tm, H, Vp, out_itemsize):
    return (H * Vp * 2                       # resident bf16 weight (single-buffered)
            + 2 * tm * H * 2                 # double-buffered bf16 x tile
            + 2 * tm * Vp * out_itemsize     # double-buffered output tile
            + int(2.5 * tm * Vp * 4)         # f32 logits / softmax temporaries
            + 2 * Vp * 4)                    # bias


def _tiled_bytes(tm, tv, H, Vp, out_itemsize):
    return (tm * Vp * 4                      # f32 logits cache for the whole row tile
            + 2 * H * tv * 2                 # double-buffered bf16 weight tile
            + 2 * tm * H * 2                 # x tile
            + 2 * tm * tv * out_itemsize     # output tile
            + 2 * tm * tv * 4                # f32 temporaries per vocab tile
            + 2 * tv * 4 + 8 * tm)           # bias + running max / sum-exp


# ------------------------------------------------------------------ kernels ----

def _mask_lm_resident_kernel(x_ref, w_ref, b_ref, o_ref):
    # x_ref: (tm, H) bf16 | w_ref: (H, Vp) bf16 | b_ref: (1, Vp) f32 | o_ref: (tm, Vp)
    logits = jnp.dot(x_ref[...], w_ref[...],
                     preferred_element_type=jnp.float32) + b_ref[...]
    m = jnp.max(logits, axis=-1, keepdims=True)
    shifted = logits - m
    lse = jnp.log(jnp.sum(jnp.exp(shifted), axis=-1, keepdims=True))
    o_ref[...] = (shifted - lse).astype(o_ref.dtype)


def _mask_lm_tiled_kernel(x_ref, w_ref, b_ref, o_ref, cache_ref, m_ref, l_ref):
    # grid = (row_tiles, 2, vocab_tiles); vocab (reduction) axes innermost.
    #   sweep p==0: matmul each vocab tile once, cache the f32 logits in VMEM and
    #               update the online running max / sum-of-exp,
    #   sweep p==1: read the cached logits (no matmul, no weight DMA) and write the
    #               normalized log-probs.
    p = pl.program_id(1)
    j = pl.program_id(2)

    @pl.when(jnp.logical_and(p == 0, j == 0))
    def _():
        m_ref[...] = jnp.full_like(m_ref, _NEG_INF)
        l_ref[...] = jnp.zeros_like(l_ref)
        # Benign value in case the pipeline ever flushes the (i, 0) output block
        # before the p==1 sweep overwrites it.
        o_ref[...] = jnp.zeros_like(o_ref)

    @pl.when(p == 0)
    def _():
        logits = jnp.dot(x_ref[...], w_ref[...],
                         preferred_element_type=jnp.float32) + b_ref[...]
        cache_ref[j] = logits
        m_new = jnp.maximum(m_ref[...], jnp.max(logits, axis=-1, keepdims=True))
        l_ref[...] = (l_ref[...] * jnp.exp(m_ref[...] - m_new)
                      + jnp.sum(jnp.exp(logits - m_new), axis=-1, keepdims=True))
        m_ref[...] = m_new

    @pl.when(p == 1)
    def _():
        lse = m_ref[...] + jnp.log(l_ref[...])
        o_ref[...] = (cache_ref[j] - lse).astype(o_ref.dtype)


# ------------------------------------------------------------------ wrapper ----

def prepare_mask_lm_params(weight, bias):
    """One-time host-side prep (hoists the per-call cast/pad HBM traffic out).

    Casts the [hidden, vocab] weight to bf16 and pads vocab to a multiple of 128;
    padded lanes get bias = -1e30 so they never affect the softmax.
    Returns (weight_bf16 [H, Vp], bias_f32 [Vp], true_vocab_size).
    """
    _, V = weight.shape
    Vp = _round_up(V, 128)
    w = weight.astype(jnp.bfloat16)
    b = bias.astype(jnp.float32)
    if Vp != V:
        w = jnp.pad(w, ((0, 0), (0, Vp - V)))
        b = jnp.pad(b, (0, Vp - V), constant_values=_NEG_INF)
    return w, b, V


def bert_mask_lm(x, weight, bias, *, vocab_size=None, tm=256, tv=2048,
                 mode="auto", out_dtype=jnp.bfloat16):
    """BERTMaskLM forward: log_softmax(x @ weight + bias, axis=-1).

    x: [B, S, H]; weight: [H, V] (transposed vs nn.Linear; may already be bf16 and
    lane-padded via prepare_mask_lm_params); bias: [V] or [1, Vw]; vocab_size gives
    the true V when padded params are passed. Returns [B, S, V] log-probabilities in
    `out_dtype` (bfloat16 by default to halve the dominant HBM writeback; pass
    jnp.float32 for full-precision output).
    """
    B, S, H = x.shape
    Hw, Vw = weight.shape
    assert Hw == H, "weight must be [hidden, vocab]"
    V = int(vocab_size) if vocab_size is not None else Vw
    assert V <= Vw
    bias2d = bias if bias.ndim == 2 else bias.reshape(1, -1)

    M = B * S
    M16 = _round_up(M, 16)               # bf16 x packs rows in sublane pairs
    out_itemsize = jnp.dtype(out_dtype).itemsize
    Vp128 = _round_up(Vw, 128)           # lane-dense output width

    def clamp_tm(t):
        return max(16, min(_round_up(t, 16), M16))

    tm = clamp_tm(tm)
    tv = max(128, _round_up(tv, 128))

    if mode == "auto":
        budget = _vmem_budget_bytes()
        tm_cands = sorted({clamp_tm(t) for t in (tm, 256, 128, 64, 32, 16)},
                          reverse=True)
        choice = None
        # Prefer the resident single-pass path (1x matmul, 1x weight DMA): shrink tm
        # before giving it up.
        for tmc in tm_cands:
            if _resident_bytes(tmc, H, Vp128, out_itemsize) <= budget:
                choice = ("resident", tmc, tv)
                break
        if choice is None:
            for tmc in tm_cands:
                for tvc in (4096, 2048, 1024, 512, 256, 128):
                    Vpc = _round_up(Vw, tvc)
                    if Vpc > max(Vp128 + 1024, int(Vp128 * 1.1)):
                        continue  # avoid excessive vocab over-padding
                    if _tiled_bytes(tmc, tvc, H, Vpc, out_itemsize) <= budget:
                        choice = ("tiled", tmc, tvc)
                        break
                if choice is not None:
                    break
        if choice is None:
            choice = ("tiled", 16, 128)
        mode, tm, tv = choice

    if mode == "resident":
        Vp = Vp128
    elif mode == "tiled":
        tv = min(tv, Vp128)
        Vp = _round_up(Vw, tv)
    else:
        raise ValueError(f"unknown mode: {mode!r}")
    Mp = _round_up(M, tm)

    # Host-side prep (no-ops when prepare_mask_lm_params was used): bf16 MXU
    # operands; zero-pad rows; pad extra vocab lanes with a very negative bias so
    # they never affect max / sum-exp.
    x2d = x.reshape(M, H).astype(jnp.bfloat16)
    if Mp != M:
        x2d = jnp.pad(x2d, ((0, Mp - M), (0, 0)))
    w = weight if weight.dtype == jnp.bfloat16 else weight.astype(jnp.bfloat16)
    b = bias2d if bias2d.dtype == jnp.float32 else bias2d.astype(jnp.float32)
    if w.shape[1] < Vp:
        w = jnp.pad(w, ((0, 0), (0, Vp - w.shape[1])))
    if b.shape[1] < Vp:
        b = jnp.pad(b, ((0, 0), (0, Vp - b.shape[1])), constant_values=_NEG_INF)

    if mode == "resident":
        def call(weight_spec):
            return pl.pallas_call(
                _mask_lm_resident_kernel,
                out_shape=jax.ShapeDtypeStruct((Mp, Vp), out_dtype),
                grid_spec=pltpu.PrefetchScalarGridSpec(
                    num_scalar_prefetch=0,
                    grid=(Mp // tm,),
                    in_specs=[
                        pl.BlockSpec((tm, H), lambda i: (i, 0)),
                        weight_spec,
                        pl.BlockSpec((1, Vp), lambda i: (0, 0)),
                    ],
                    out_specs=pl.BlockSpec((tm, Vp), lambda i: (i, 0)),
                ),
                compiler_params=_compiler_params(("parallel",)),
            )(x2d, w, b)

        try:
            # Constant-index resident weight: single-buffer it so it costs 1x VMEM.
            out = call(pl.BlockSpec((H, Vp), lambda i: (0, 0),
                                    pipeline_mode=pl.Buffered(1)))
        except Exception:
            if (_resident_bytes(tm, H, Vp, out_itemsize) + H * Vp * 2
                    <= (_vmem_limit_bytes() or (32 << 20))):
                out = call(pl.BlockSpec((H, Vp), lambda i: (0, 0)))
            else:
                # Double-buffering the resident weight would not fit: fall back to
                # the vocab-tiled path instead of silently blowing VMEM.
                return bert_mask_lm(x, w, b, vocab_size=V, mode="tiled",
                                    tm=tm, tv=tv, out_dtype=out_dtype)

    else:  # tiled
        nvt = Vp // tv
        # Weight / bias indices are pinned to the last tile during the p==1 write
        # sweep so W streams exactly once per row tile.
        col_idx = lambda i, p, j: (0, (1 - p) * j + p * (nvt - 1))
        out = pl.pallas_call(
            _mask_lm_tiled_kernel,
            out_shape=jax.ShapeDtypeStruct((Mp, Vp), out_dtype),
            grid_spec=pltpu.PrefetchScalarGridSpec(
                num_scalar_prefetch=0,
                grid=(Mp // tm, 2, nvt),
                in_specs=[
                    pl.BlockSpec((tm, H), lambda i, p, j: (i, 0)),
                    pl.BlockSpec((H, tv), col_idx),
                    pl.BlockSpec((1, tv), col_idx),
                ],
                # The p==0 sweep keeps the output index pinned at (i, 0) (written
                # with a benign value) so no partially-written block reaches HBM;
                # the p==1 sweep visits each (i, j) exactly once with final values.
                out_specs=pl.BlockSpec((tm, tv), lambda i, p, j: (i, p * j)),
                scratch_shapes=[
                    pltpu.VMEM((nvt, tm, tv), jnp.float32),   # cached logits
                    pltpu.VMEM((tm, 1), jnp.float32),         # running max
                    pltpu.VMEM((tm, 1), jnp.float32),         # running sum-exp
                ],
            ),
            compiler_params=_compiler_params(("parallel", "arbitrary", "arbitrary")),
        )(x2d, w, b)

    if Mp != M or Vp != V:
        out = out[:M, :V]
    return out.reshape(B, S, V)


def reference(x, weight, bias):
    logits = jnp.einsum("bsh,hv->bsv", x, weight) + bias
    return jax.nn.log_softmax(logits, axis=-1)


if __name__ == "__main__":
    key = jax.random.PRNGKey(0)
    # Small shapes; chosen so the row-padding (B*S=14 -> 16) and vocab-padding
    # (200 -> 256 lanes) paths are both exercised.
    B, S, H, V = 2, 7, 32, 200

    k_x, k_w, k_b = jax.random.split(key, 3)
    bound = 1.0 / (H ** 0.5)  # nn.Linear-style uniform init
    x = jax.random.normal(k_x, (B, S, H), dtype=jnp.float32)
    weight = jax.random.uniform(k_w, (H, V), minval=-bound, maxval=bound,
                                dtype=jnp.float32)
    bias = jax.random.uniform(k_b, (V,), minval=-bound, maxval=bound,
                              dtype=jnp.float32)

    ref = jax.block_until_ready(reference(x, weight, bias))

    # 1. Default path: auto mode (resident at these sizes), bf16 output, weights
    #    prepared once (cast + pad hoisted out of the per-call path).
    w_p, b_p, v_true = prepare_mask_lm_params(weight, bias)
    out_default = jax.block_until_ready(
        bert_mask_lm(x, w_p, b_p, vocab_size=v_true))

    # 2. Resident single-pass path with f32 output (tight check).
    out_res = jax.block_until_ready(
        bert_mask_lm(x, weight, bias, mode="resident", out_dtype=jnp.float32))

    # 3. Vocab-tiled two-sweep path with the in-VMEM logits cache (small tv forces
    #    multiple vocab tiles), f32 output.
    out_til = jax.block_until_ready(
        bert_mask_lm(x, weight, bias, mode="tiled", tm=64, tv=128,
                     out_dtype=jnp.float32))

    checks = (
        (out_default, 1e-1, 1e-2),   # bf16 output: looser tolerances
        (out_res, 5e-2, 2e-3),       # bf16 MXU operands, f32 math/output
        (out_til, 5e-2, 2e-3),
    )
    for out, atol_lp, atol_p in checks:
        assert out.shape == (B, S, V)
        out_f32 = out.astype(jnp.float32)
        assert jnp.allclose(out_f32, ref, atol=atol_lp, rtol=0), "mismatch vs reference"
        # log-softmax rows must sum (in prob space) to ~1
        assert jnp.allclose(jnp.exp(out_f32).sum(-1), 1.0, atol=atol_p)

    print("KERNEL_OK")
</pallas_src>

<mosaic_0001>
module attributes {stable_mosaic.version = 11 : i64} {
  func.func @_mask_lm_resident_kernel(%arg0: i32, %arg1: memref<16x32xbf16, #tpu.memory_space<vmem>>, %arg2: memref<32x256xbf16, #tpu.memory_space<vmem>>, %arg3: memref<1x256xf32, #tpu.memory_space<vmem>>, %arg4: memref<16x256xbf16, #tpu.memory_space<vmem>>) attributes {dimension_semantics = [#tpu.dimension_semantics<parallel>], iteration_bounds = array<i64: 1>, scalar_prefetch = 0 : i64, scratch_operands = 0 : i64, tpu.core_type = #tpu.core_type<tc>, window_params = [{transform_indices = @transform_0, window_bounds = array<i64: 16, 32>}, {pipeline_mode = #tpu.pipeline_mode<synchronous>, transform_indices = @transform_1, window_bounds = array<i64: 32, 256>}, {pipeline_mode = #tpu.pipeline_mode<synchronous>, transform_indices = @transform_2, window_bounds = array<i64: 1, 256>}, {transform_indices = @transform_3, window_bounds = array<i64: 16, 256>}]} {
    %c0 = arith.constant 0 : index
    %c0_0 = arith.constant 0 : index
    %0 = vector.load %arg1[%c0, %c0_0] : memref<16x32xbf16, #tpu.memory_space<vmem>>, vector<16x32xbf16>
    %c0_1 = arith.constant 0 : index
    %c0_2 = arith.constant 0 : index
    %1 = vector.load %arg2[%c0_1, %c0_2] : memref<32x256xbf16, #tpu.memory_space<vmem>>, vector<32x256xbf16>
    %cst = arith.constant dense<0.000000e+00> : vector<16x256xf32>
    %2 = tpu.matmul %0, %1, %cst {dimension_numbers = #tpu.dot_dimension_numbers<[1], [0], [0], [1], [0, 0, 1, 1], [], []>} : vector<16x32xbf16>, vector<32x256xbf16>, vector<16x256xf32> -> vector<16x256xf32>
    %c0_3 = arith.constant 0 : index
    %c0_4 = arith.constant 0 : index
    %3 = vector.load %arg3[%c0_3, %c0_4] : memref<1x256xf32, #tpu.memory_space<vmem>>, vector<1x256xf32>
    %4 = vector.broadcast %3 : vector<1x256xf32> to vector<16x256xf32>
    %5 = arith.addf %2, %4 : vector<16x256xf32>
    %cst_5 = arith.constant dense<0xFF800000> : vector<16xf32>
    %6 = vector.multi_reduction <maximumf>, %5, %cst_5 [1] : vector<16x256xf32> to vector<16xf32>
    %7 = vector.shape_cast %6 : vector<16xf32> to vector<16x1xf32>
    %8 = vector.broadcast %7 : vector<16x1xf32> to vector<16x256xf32>
    %9 = arith.subf %5, %8 : vector<16x256xf32>
    %10 = math.exp %9 : vector<16x256xf32>
    %cst_6 = arith.constant dense<0.000000e+00> : vector<16xf32>
    %11 = vector.multi_reduction <add>, %10, %cst_6 [1] : vector<16x256xf32> to vector<16xf32>
    %12 = vector.shape_cast %11 : vector<16xf32> to vector<16x1xf32>
    %13 = math.log %12 : vector<16x1xf32>
    %14 = vector.broadcast %13 : vector<16x1xf32> to vector<16x256xf32>
    %15 = arith.subf %9, %14 : vector<16x256xf32>
    %16 = arith.truncf %15 : vector<16x256xf32> to vector<16x256xbf16>
    %c0_7 = arith.constant 0 : index
    %c0_8 = arith.constant 0 : index
    %17 = vector.load %arg4[%c0_7, %c0_8] : memref<16x256xbf16, #tpu.memory_space<vmem>>, vector<16x256xbf16>
    tpu.vector_store %arg4[%c0_7, %c0_8], %16 {strides = array<i32>} : memref<16x256xbf16, #tpu.memory_space<vmem>>, vector<16x256xbf16>,
    return
  }
  func.func @transform_0(%arg0: i32) -> (i32, i32) {
    %c0_i32 = arith.constant 0 : i32
    %c0_i32_0 = arith.constant 0 : i32
    return %arg0, %c0_i32 : i32, i32
  }
  func.func @transform_1(%arg0: i32) -> (i32, i32) {
    %c0_i32 = arith.constant 0 : i32
    %c0_i32_0 = arith.constant 0 : i32
    %c0_i32_1 = arith.constant 0 : i32
    return %c0_i32, %c0_i32_0 : i32, i32
  }
  func.func @transform_2(%arg0: i32) -> (i32, i32) {
    %c0_i32 = arith.constant 0 : i32
    %c0_i32_0 = arith.constant 0 : i32
    %c0_i32_1 = arith.constant 0 : i32
    return %c0_i32, %c0_i32_0 : i32, i32
  }
  func.func @transform_3(%arg0: i32) -> (i32, i32) {
    %c0_i32 = arith.constant 0 : i32
    %c0_i32_0 = arith.constant 0 : i32
    return %arg0, %c0_i32 : i32, i32
  }
}

module attributes {stable_mosaic.version = 11 : i64} {
  func.func @_mask_lm_resident_kernel(%arg0: i32, %arg1: memref<16x32xbf16, #tpu.memory_space<vmem>>, %arg2: memref<32x256xbf16, #tpu.memory_space<vmem>>, %arg3: memref<1x256xf32, #tpu.memory_space<vmem>>, %arg4: memref<16x256xbf16, #tpu.memory_space<vmem>>) attributes {dimension_semantics = [#tpu.dimension_semantics<parallel>], iteration_bounds = array<i64: 1>, scalar_prefetch = 0 : i64, scratch_operands = 0 : i64, tpu.core_type = #tpu.core_type<tc>, window_params = [{transform_indices = @transform_0, window_bounds = array<i64: 16, 32>}, {pipeline_mode = #tpu.pipeline_mode<synchronous>, transform_indices = @transform_1, window_bounds = array<i64: 32, 256>}, {pipeline_mode = #tpu.pipeline_mode<synchronous>, transform_indices = @transform_2, window_bounds = array<i64: 1, 256>}, {transform_indices = @transform_3, window_bounds = array<i64: 16, 256>}]} {
    %c0 = arith.constant 0 : index
    %c0_0 = arith.constant 0 : index
    %0 = vector.load %arg1[%c0, %c0_0] : memref<16x32xbf16, #tpu.memory_space<vmem>>, vector<16x32xbf16>
    %c0_1 = arith.constant 0 : index
    %c0_2 = arith.constant 0 : index
    %1 = vector.load %arg2[%c0_1, %c0_2] : memref<32x256xbf16, #tpu.memory_space<vmem>>, vector<32x256xbf16>
    %cst = arith.constant dense<0.000000e+00> : vector<16x256xf32>
    %2 = tpu.matmul %0, %1, %cst {dimension_numbers = #tpu.dot_dimension_numbers<[1], [0], [0], [1], [0, 0, 1, 1], [], []>} : vector<16x32xbf16>, vector<32x256xbf16>, vector<16x256xf32> -> vector<16x256xf32>
    %c0_3 = arith.constant 0 : index
    %c0_4 = arith.constant 0 : index
    %3 = vector.load %arg3[%c0_3, %c0_4] : memref<1x256xf32, #tpu.memory_space<vmem>>, vector<1x256xf32>
    %4 = vector.broadcast %3 : vector<1x256xf32> to vector<16x256xf32>
    %5 = arith.addf %2, %4 : vector<16x256xf32>
    %cst_5 = arith.constant dense<0xFF800000> : vector<16xf32>
    %6 = vector.multi_reduction <maximumf>, %5, %cst_5 [1] : vector<16x256xf32> to vector<16xf32>
    %7 = vector.shape_cast %6 : vector<16xf32> to vector<16x1xf32>
    %8 = vector.broadcast %7 : vector<16x1xf32> to vector<16x256xf32>
    %9 = arith.subf %5, %8 : vector<16x256xf32>
    %10 = math.exp %9 : vector<16x256xf32>
    %cst_6 = arith.constant dense<0.000000e+00> : vector<16xf32>
    %11 = vector.multi_reduction <add>, %10, %cst_6 [1] : vector<16x256xf32> to vector<16xf32>
    %12 = vector.shape_cast %11 : vector<16xf32> to vector<16x1xf32>
    %13 = math.log %12 : vector<16x1xf32>
    %14 = vector.broadcast %13 : vector<16x1xf32> to vector<16x256xf32>
    %15 = arith.subf %9, %14 : vector<16x256xf32>
    %16 = arith.truncf %15 : vector<16x256xf32> to vector<16x256xbf16>
    %c0_7 = arith.constant 0 : index
    %c0_8 = arith.constant 0 : index
    %17 = vector.load %arg4[%c0_7, %c0_8] : memref<16x256xbf16, #tpu.memory_space<vmem>>, vector<16x256xbf16>
    tpu.vector_store %arg4[%c0_7, %c0_8], %16 {strides = array<i32>} : memref<16x256xbf16, #tpu.memory_space<vmem>>, vector<16x256xbf16>,
    return
  }
  func.func @transform_0(%arg0: i32) -> (i32, i32) {
    %c0_i32 = arith.constant 0 : i32
    %c0_i32_0 = arith.constant 0 : i32
    return %arg0, %c0_i32 : i32, i32
  }
  func.func @transform_1(%arg0: i32) -> (i32, i32) {
    %c0_i32 = arith.constant 0 : i32
    %c0_i32_0 = arith.constant 0 : i32
    %c0_i32_1 = arith.constant 0 : i32
    return %c0_i32, %c0_i32_0 : i32, i32
  }
  func.func @transform_2(%arg0: i32) -> (i32, i32) {
    %c0_i32 = arith.constant 0 : i32
    %c0_i32_0 = arith.constant 0 : i32
    %c0_i32_1 = arith.constant 0 : i32
    return %c0_i32, %c0_i32_0 : i32, i32
  }
  func.func @transform_3(%arg0: i32) -> (i32, i32) {
    %c0_i32 = arith.constant 0 : i32
    %c0_i32_0 = arith.constant 0 : i32
    return %arg0, %c0_i32 : i32, i32
  }
}

</mosaic_0001>

<llo_original>
// kernel: tpu_custom_call.1
$region0: #{tpu_custom_call.1}
  #allocation0 [shape = 'u32[]', space=smem, size = 0x4, offset = 0x4, fixed_abs, tag = 'smem constant byte address 0x4 - core index']
  #allocation1 [shape = 'u32[144,128]{1,0:T(1,128)}', space=vmem, size = 0x12000, scoped, tag = 'internal scratch']
  %s0 = inlined_call_operand.hbm [shape: bf16[16,32], index: 0, kind: input, shape index: {}]
  %s1 = inlined_call_operand.hbm [shape: bf16[32,256], index: 1, kind: input, shape index: {}]
  %s2 = inlined_call_operand.vmem [shape: f32[1,256], index: 2, kind: input, shape index: {}]
  %s3 = inlined_call_operand.hbm [shape: bf16[16,256], index: 3, kind: output, shape index: {}]
  %s4 = sld [smem:[#allocation0]]
  $region30: #{tpu_custom_call.1} parent=0
    _
  %s6 = ssub.s32 1, %s4
  %s7 = scalar_select 0, %s6, %s4
  $region1: #{tpu_custom_call.1} parent=0
    #allocation2 [shape = 'u8[4096]{0}', space=vmem, size = 0x1000, scoped, tag = 'input window, operand 0, single buffered']
    #allocation3 [shape = 's32[1]{0}', space=sflag, size = 0x4, scoped, tag = 'scoped memory for tpu_custom_call.1']
    #allocation4 [shape = 's32[1]{0}', space=sflag, size = 0x4, scoped, tag = 'scoped memory for tpu_custom_call.1']
    #allocation5 [shape = 'u8[16384]{0}', space=vmem, size = 0x4000, scoped, tag = 'input window, operand 1, single buffered']
    #allocation6 [shape = 's32[1]{0}', space=sflag, size = 0x4, scoped, tag = 'scoped memory for tpu_custom_call.1']
    #allocation7 [shape = 'u8[8192]{0}', space=vmem, size = 0x2000, scoped, tag = 'output window, operand 0, single buffered']
    %8 = vsyncpa [#allocation3], 0
    %9 = vsyncpa [#allocation6], 0
    %10 = vsyncpa [#allocation4], 0
    // Predicated region
    $region2: #{tpu_custom_call.1} parent=1 // pred_check
      _
    $region3: #{tpu_custom_call.1} parent=1 // pred_check_branch
      %12 = sbr.rel (0) target = $region5
    $region4: #{tpu_custom_call.1} parent=1 // pred_region
      %s14 = ssub.s32 128, 128
      %15 = vsyncadd [#allocation3], %s14
      %s16 = sshll.u32 [#allocation2], 4
      %s17 = int_to_ptr.vmem [resolvable:$true] %s16
      %22 = dma.hbm_to_vmem [thread:$0]  %s0, 128, %s17, [#allocation3], 64, 64, 4
    $region5: #{tpu_custom_call.1} parent=1 // pred_fallthru
      _
    // Predicated region
    $region6: #{tpu_custom_call.1} parent=1 // pred_check
      _
    $region7: #{tpu_custom_call.1} parent=1 // pred_check_branch
      %24 = sbr.rel (0) target = $region9
    $region8: #{tpu_custom_call.1} parent=1 // pred_region
      %s26 = ssub.s32 512, 512
      %27 = vsyncadd [#allocation6], %s26
      %s28 = sshll.u32 [#allocation5], 4
      %s29 = int_to_ptr.vmem [resolvable:$true] %s28
      %34 = dma.hbm_to_vmem [thread:$0]  %s1, 512, %s29, [#allocation6], 128, 128, 8
    $region9: #{tpu_custom_call.1} parent=1 // pred_fallthru
      _
    // Predicated region
    $region10: #{tpu_custom_call.1} parent=1 // pred_check
      _
    $region11: #{tpu_custom_call.1} parent=1 // pred_check_branch
      %36 = sbr.rel (0) target = $region13
    $region12: #{tpu_custom_call.1} parent=1 // pred_region
      _
    $region13: #{tpu_custom_call.1} parent=1 // pred_fallthru
      _
    // Predicated region
    $region14: #{tpu_custom_call.1} parent=1 // pred_check
      _
    $region15: #{tpu_custom_call.1} parent=1 // pred_check_branch
      %38 = sbr.rel (0) target = $region17
    $region16: #{tpu_custom_call.1} parent=1 // pred_region
      %39 = dma.done [#allocation3], 128
    $region17: #{tpu_custom_call.1} parent=1 // pred_fallthru
      _
    // Predicated region
    $region18: #{tpu_custom_call.1} parent=1 // pred_check
      _
    $region19: #{tpu_custom_call.1} parent=1 // pred_check_branch
      %41 = sbr.rel (0) target = $region21
    $region20: #{tpu_custom_call.1} parent=1 // pred_region
      %42 = dma.done [#allocation6], 512
    $region21: #{tpu_custom_call.1} parent=1 // pred_fallthru
      _
    %v44 = vld [vmem:[#allocation2] sm:$0xf]
    %v45 = vld [vmem:[#allocation2 + $0x4] sm:$0xf]
    %v46 = vld [vmem:[#allocation5] sm:$0xff]
    %v47 = vld [vmem:[#allocation5 + $0x8] sm:$0xff]
    %v48 = vld [vmem:[#allocation5 + $0x10] sm:$0xff]
    %v49 = vld [vmem:[#allocation5 + $0x18] sm:$0xff]
    %v50 = vld [vmem:[%s2] sm:$0x3]
    %v52 = vlaneseq
    %v53 = vshrl.u32 %v52, 7
    %v54 = vsub.s32 0, %v53
    %v55 = vrot.slane %v50, %v54
    %v56 = vlaneseq
    %v57 = vshrl.u32 %v56, 7
    %v58 = vsub.s32 1, %v57
    %v59 = vrot.slane %v50, %v58
    %v64 = vunpack.c.l.b16 %v44
    %v65 = vunpack.c.l.b16 %v45
    %v66 = vpack.c.b16 %v65, %v64
    %v71 = vunpack.c.l.b16 %v46
    %v72 = vunpack.c.h.b16 %v46
    %v73 = vunpack.c.l.b16 %v47
    %v74 = vunpack.c.h.b16 %v47
    %v75 = vunpack.c.l.b16 %v48
    %v76 = vunpack.c.h.b16 %v48
    %v77 = vunpack.c.l.b16 %v49
    %v78 = vunpack.c.h.b16 %v49
    %v79 = vpack.c.b16 %v73, %v71
    %v80 = vpack.c.b16 %v74, %v72
    %v81 = vpack.c.b16 %v77, %v75
    %v82 = vpack.c.b16 %v78, %v76
    %vm87 = vcmask 261120
    %v89 = vsel %vm87, %v66, 0
    %91 = vmatprep.subr.bf16.mxu0 %v80
    %92 = vmatpush1.bf16.msra.mxu0 %v79
    %93 = vmatprep.subr.bf16.mxu0 %v82
    %94 = vmatpush1.bf16.msra.mxu0 %v81
    %95 = vmatprep.subr.bf16.mxu0 0
    %96 = vmatpush1.bf16.msra.mxu0 0
    %97 = vmatprep.subr.bf16.mxu0 0
    %98 = vmatpush1.bf16.msra.mxu0 0
    %99 = vmatprep.subr.bf16.mxu0 0
    %100 = vmatpush1.bf16.msra.mxu0 0
    %101 = vmatprep.subr.bf16.mxu0 0
    %102 = vmatpush1.bf16.msra.mxu0 0
    %103 = vmatprep.subr.bf16.mxu0 0
    %104 = vmatpush1.bf16.msra.mxu0 0
    %105 = vmatprep.subr.bf16.mxu0 0
    %106 = vmatpush1.bf16.msra.mxu0 0
    %107 = vmatprep.subr.bf16.mxu0 0
    %108 = vmatpush1.bf16.msra.mxu0 0
    %109 = vmatprep.subr.bf16.mxu0 0
    %110 = vmatpush1.bf16.msra.mxu0 0
    %111 = vmatprep.subr.bf16.mxu0 0
    %112 = vmatpush1.bf16.msra.mxu0 0
    %113 = vmatprep.subr.bf16.mxu0 0
    %114 = vmatpush1.bf16.msra.mxu0 0
    %115 = vmatprep.subr.bf16.mxu0 0
    %116 = vmatpush1.bf16.msra.mxu0 0
    %117 = vmatprep.subr.bf16.mxu0 0
    %118 = vmatpush1.bf16.msra.mxu0 0
    %119 = vmatprep.subr.bf16.mxu0 0
    %120 = vmatpush1.bf16.msra.mxu0 0
    %121 = vmatprep.subr.bf16.mxu0 0
    %122 = vmatpush1.bf16.msra.mxu0 0
    %123 = vmatprep.mubr.bf16.mxu0 0
    %124 = vmatmul.mubr.bf16.gmra.mrb[0].mxu0 %v89
    %v125 = vpop.f32.mrb[0].mxu0
    %v126 = vadd.f32 %v55, %v125
    %v127 = vpop.f32.mrb[0].mxu0
    %v128 = vadd.f32 %v59, %v127
    %v129 = vpop.f32.mrb[0].mxu0
    %v130 = vadd.f32 %v55, %v129
    %v131 = vpop.f32.mrb[0].mxu0
    %v132 = vadd.f32 %v59, %v131
    %133 = vdwg.mxu0
    %v134 = vmax.f32 %v126, %v128
    %135 = vmax.xlane.f32.xlu0 %v134
    %v136 = vpop.xlane.xlu0 %135
    %v137 = vmax.f32 %v130, %v132
    %138 = vmax.xlane.f32.xlu0 %v137
    %v139 = vpop.xlane.xlu0 %138
    %v140 = vsub.f32 %v126, %v136
    %v141 = vsub.f32 %v128, %v136
    %v142 = vsub.f32 %v130, %v139
    %v143 = vsub.f32 %v132, %v139
    %v144 = vmul.f32 %v140, 1.442695
    %v145 = vpow.pop %v144
    %v146 = vmul.f32 %v141, 1.442695
    %v147 = vpow.pop %v146
    %v148 = vmul.f32 %v142, 1.442695
    %v149 = vpow.pop %v148
    %v150 = vmul.f32 %v143, 1.442695
    %v151 = vpow.pop %v150
    %v152 = vadd.f32 %v145, %v147
    %153 = vadd.xlane.f32.xlu0 %v152
    %v154 = vpop.xlane.xlu0 %153
    %v155 = vadd.f32 %v149, %v151
    %156 = vadd.xlane.f32.xlu0 %v155
    %v157 = vpop.xlane.xlu0 %156
    %v158 = vlog2.pop %v154
    %v159 = vmul.f32 %v158, 0.6931472
    %v160 = vlog2.pop %v157
    %v161 = vmul.f32 %v160, 0.6931472
    %v162 = vsub.f32 %v140, %v159
    %v163 = vsub.f32 %v141, %v159
    %v164 = vsub.f32 %v142, %v161
    %v165 = vsub.f32 %v143, %v161
    %v166 = vpack.c.bf16 %v164, %v162
    %v167 = vpack.c.bf16 %v165, %v163
    %v170 = vunpack.c.l.b16 %v166
    %v171 = vunpack.c.l.b16 %v167
    %v172 = vunpack.c.h.b16 %v166
    %v173 = vunpack.c.h.b16 %v167
    %v174 = vpack.c.b16 %v171, %v170
    %v175 = vpack.c.b16 %v173, %v172
    %178 = vst [vmem:[#allocation7] sm:$0xff] %v174
    %179 = vst [vmem:[#allocation7 + $0x8] sm:$0xff] %v175
    // Predicated region
    $region22: #{tpu_custom_call.1} parent=1 // pred_check
      _
    $region23: #{tpu_custom_call.1} parent=1 // pred_check_branch
      %181 = sbr.rel (0) target = $region25
    $region24: #{tpu_custom_call.1} parent=1 // pred_region
      %s183 = ssub.s32 256, 256
      %184 = vsyncadd [#allocation4], %s183
      %s185 = sshll.u32 [#allocation7], 4
      %s186 = int_to_ptr.vmem [resolvable:$true] %s185
      %191 = dma.vmem_to_hbm [thread:$0]  %s186, 256, %s3, [#allocation4], 128, 128, 8
    $region25: #{tpu_custom_call.1} parent=1 // pred_fallthru
      _
    // Predicated region
    $region26: #{tpu_custom_call.1} parent=1 // pred_check
      _
    $region27: #{tpu_custom_call.1} parent=1 // pred_check_branch
      %193 = sbr.rel (0) target = $region29
    $region28: #{tpu_custom_call.1} parent=1 // pred_region
      %194 = dma.done [#allocation4], 256
    $region29: #{tpu_custom_call.1} parent=1 // pred_fallthru
      _
    %195 = vsyncpa [#allocation3], 1
    %196 = vsyncpa [#allocation6], 1
    %197 = vsyncpa [#allocation4], 1

// kernel: tpu_custom_call.1
$region0: #{tpu_custom_call.1}
  #allocation0 [shape = 'u32[]', space=smem, size = 0x4, offset = 0x4, fixed_abs, tag = 'smem constant byte address 0x4 - core index']
  #allocation1 [shape = 'u32[144,128]{1,0:T(1,128)}', space=vmem, size = 0x12000, scoped, tag = 'internal scratch']
  %s0 = inlined_call_operand.hbm [shape: bf16[16,32], index: 0, kind: input, shape index: {}]
  %s1 = inlined_call_operand.hbm [shape: bf16[32,256], index: 1, kind: input, shape index: {}]
  %s2 = inlined_call_operand.vmem [shape: f32[1,256], index: 2, kind: input, shape index: {}]
  %s3 = inlined_call_operand.hbm [shape: bf16[16,256], index: 3, kind: output, shape index: {}]
  %s4 = sld [smem:[#allocation0]]
  $region30: #{tpu_custom_call.1} parent=0
    _
  %s6 = ssub.s32 1, %s4
  %s7 = scalar_select 0, %s6, %s4
  $region1: #{tpu_custom_call.1} parent=0
    #allocation2 [shape = 'u8[4096]{0}', space=vmem, size = 0x1000, scoped, tag = 'input window, operand 0, single buffered']
    #allocation3 [shape = 's32[1]{0}', space=sflag, size = 0x4, scoped, tag = 'scoped memory for tpu_custom_call.1']
    #allocation4 [shape = 's32[1]{0}', space=sflag, size = 0x4, scoped, tag = 'scoped memory for tpu_custom_call.1']
    #allocation5 [shape = 'u8[16384]{0}', space=vmem, size = 0x4000, scoped, tag = 'input window, operand 1, single buffered']
    #allocation6 [shape = 's32[1]{0}', space=sflag, size = 0x4, scoped, tag = 'scoped memory for tpu_custom_call.1']
    #allocation7 [shape = 'u8[8192]{0}', space=vmem, size = 0x2000, scoped, tag = 'output window, operand 0, single buffered']
    %8 = vsyncpa [#allocation3], 0
    %9 = vsyncpa [#allocation6], 0
    %10 = vsyncpa [#allocation4], 0
    // Predicated region
    $region2: #{tpu_custom_call.1} parent=1 // pred_check
      _
    $region3: #{tpu_custom_call.1} parent=1 // pred_check_branch
      %12 = sbr.rel (0) target = $region5
    $region4: #{tpu_custom_call.1} parent=1 // pred_region
      %s14 = ssub.s32 128, 128
      %15 = vsyncadd [#allocation3], %s14
      %s16 = sshll.u32 [#allocation2], 4
      %s17 = int_to_ptr.vmem [resolvable:$true] %s16
      %22 = dma.hbm_to_vmem [thread:$0]  %s0, 128, %s17, [#allocation3], 64, 64, 4
    $region5: #{tpu_custom_call.1} parent=1 // pred_fallthru
      _
    // Predicated region
    $region6: #{tpu_custom_call.1} parent=1 // pred_check
      _
    $region7: #{tpu_custom_call.1} parent=1 // pred_check_branch
      %24 = sbr.rel (0) target = $region9
    $region8: #{tpu_custom_call.1} parent=1 // pred_region
      %s26 = ssub.s32 512, 512
      %27 = vsyncadd [#allocation6], %s26
      %s28 = sshll.u32 [#allocation5], 4
      %s29 = int_to_ptr.vmem [resolvable:$true] %s28
      %34 = dma.hbm_to_vmem [thread:$0]  %s1, 512, %s29, [#allocation6], 128, 128, 8
    $region9: #{tpu_custom_call.1} parent=1 // pred_fallthru
      _
    // Predicated region
    $region10: #{tpu_custom_call.1} parent=1 // pred_check
      _
    $region11: #{tpu_custom_call.1} parent=1 // pred_check_branch
      %36 = sbr.rel (0) target = $region13
    $region12: #{tpu_custom_call.1} parent=1 // pred_region
      _
    $region13: #{tpu_custom_call.1} parent=1 // pred_fallthru
      _
    // Predicated region
    $region14: #{tpu_custom_call.1} parent=1 // pred_check
      _
    $region15: #{tpu_custom_call.1} parent=1 // pred_check_branch
      %38 = sbr.rel (0) target = $region17
    $region16: #{tpu_custom_call.1} parent=1 // pred_region
      %39 = dma.done [#allocation3], 128
    $region17: #{tpu_custom_call.1} parent=1 // pred_fallthru
      _
    // Predicated region
    $region18: #{tpu_custom_call.1} parent=1 // pred_check
      _
    $region19: #{tpu_custom_call.1} parent=1 // pred_check_branch
      %41 = sbr.rel (0) target = $region21
    $region20: #{tpu_custom_call.1} parent=1 // pred_region
      %42 = dma.done [#allocation6], 512
    $region21: #{tpu_custom_call.1} parent=1 // pred_fallthru
      _
    %v44 = vld [vmem:[#allocation2] sm:$0xf]
    %v45 = vld [vmem:[#allocation2 + $0x4] sm:$0xf]
    %v46 = vld [vmem:[#allocation5] sm:$0xff]
    %v47 = vld [vmem:[#allocation5 + $0x8] sm:$0xff]
    %v48 = vld [vmem:[#allocation5 + $0x10] sm:$0xff]
    %v49 = vld [vmem:[#allocation5 + $0x18] sm:$0xff]
    %v50 = vld [vmem:[%s2] sm:$0x3]
    %v52 = vlaneseq
    %v53 = vshrl.u32 %v52, 7
    %v54 = vsub.s32 0, %v53
    %v55 = vrot.slane %v50, %v54
    %v56 = vlaneseq
    %v57 = vshrl.u32 %v56, 7
    %v58 = vsub.s32 1, %v57
    %v59 = vrot.slane %v50, %v58
    %v64 = vunpack.c.l.b16 %v44
    %v65 = vunpack.c.l.b16 %v45
    %v66 = vpack.c.b16 %v65, %v64
    %v71 = vunpack.c.l.b16 %v46
    %v72 = vunpack.c.h.b16 %v46
    %v73 = vunpack.c.l.b16 %v47
    %v74 = vunpack.c.h.b16 %v47
    %v75 = vunpack.c.l.b16 %v48
    %v76 = vunpack.c.h.b16 %v48
    %v77 = vunpack.c.l.b16 %v49
    %v78 = vunpack.c.h.b16 %v49
    %v79 = vpack.c.b16 %v73, %v71
    %v80 = vpack.c.b16 %v74, %v72
    %v81 = vpack.c.b16 %v77, %v75
    %v82 = vpack.c.b16 %v78, %v76
    %vm87 = vcmask 261120
    %v89 = vsel %vm87, %v66, 0
    %91 = vmatprep.subr.bf16.mxu0 %v80
    %92 = vmatpush1.bf16.msra.mxu0 %v79
    %93 = vmatprep.subr.bf16.mxu0 %v82
    %94 = vmatpush1.bf16.msra.mxu0 %v81
    %95 = vmatprep.subr.bf16.mxu0 0
    %96 = vmatpush1.bf16.msra.mxu0 0
    %97 = vmatprep.subr.bf16.mxu0 0
    %98 = vmatpush1.bf16.msra.mxu0 0
    %99 = vmatprep.subr.bf16.mxu0 0
    %100 = vmatpush1.bf16.msra.mxu0 0
    %101 = vmatprep.subr.bf16.mxu0 0
    %102 = vmatpush1.bf16.msra.mxu0 0
    %103 = vmatprep.subr.bf16.mxu0 0
    %104 = vmatpush1.bf16.msra.mxu0 0
    %105 = vmatprep.subr.bf16.mxu0 0
    %106 = vmatpush1.bf16.msra.mxu0 0
    %107 = vmatprep.subr.bf16.mxu0 0
    %108 = vmatpush1.bf16.msra.mxu0 0
    %109 = vmatprep.subr.bf16.mxu0 0
    %110 = vmatpush1.bf16.msra.mxu0 0
    %111 = vmatprep.subr.bf16.mxu0 0
    %112 = vmatpush1.bf16.msra.mxu0 0
    %113 = vmatprep.subr.bf16.mxu0 0
    %114 = vmatpush1.bf16.msra.mxu0 0
    %115 = vmatprep.subr.bf16.mxu0 0
    %116 = vmatpush1.bf16.msra.mxu0 0
    %117 = vmatprep.subr.bf16.mxu0 0
    %118 = vmatpush1.bf16.msra.mxu0 0
    %119 = vmatprep.subr.bf16.mxu0 0
    %120 = vmatpush1.bf16.msra.mxu0 0
    %121 = vmatprep.subr.bf16.mxu0 0
    %122 = vmatpush1.bf16.msra.mxu0 0
    %123 = vmatprep.mubr.bf16.mxu0 0
    %124 = vmatmul.mubr.bf16.gmra.mrb[0].mxu0 %v89
    %v125 = vpop.f32.mrb[0].mxu0
    %v126 = vadd.f32 %v55, %v125
    %v127 = vpop.f32.mrb[0].mxu0
    %v128 = vadd.f32 %v59, %v127
    %v129 = vpop.f32.mrb[0].mxu0
    %v130 = vadd.f32 %v55, %v129
    %v131 = vpop.f32.mrb[0].mxu0
    %v132 = vadd.f32 %v59, %v131
    %133 = vdwg.mxu0
    %v134 = vmax.f32 %v126, %v128
    %135 = vmax.xlane.f32.xlu0 %v134
    %v136 = vpop.xlane.xlu0 %135
    %v137 = vmax.f32 %v130, %v132
    %138 = vmax.xlane.f32.xlu0 %v137
    %v139 = vpop.xlane.xlu0 %138
    %v140 = vsub.f32 %v126, %v136
    %v141 = vsub.f32 %v128, %v136
    %v142 = vsub.f32 %v130, %v139
    %v143 = vsub.f32 %v132, %v139
    %v144 = vmul.f32 %v140, 1.442695
    %v145 = vpow.pop %v144
    %v146 = vmul.f32 %v141, 1.442695
    %v147 = vpow.pop %v146
    %v148 = vmul.f32 %v142, 1.442695
    %v149 = vpow.pop %v148
    %v150 = vmul.f32 %v143, 1.442695
    %v151 = vpow.pop %v150
    %v152 = vadd.f32 %v145, %v147
    %153 = vadd.xlane.f32.xlu0 %v152
    %v154 = vpop.xlane.xlu0 %153
    %v155 = vadd.f32 %v149, %v151
    %156 = vadd.xlane.f32.xlu0 %v155
    %v157 = vpop.xlane.xlu0 %156
    %v158 = vlog2.pop %v154
    %v159 = vmul.f32 %v158, 0.6931472
    %v160 = vlog2.pop %v157
    %v161 = vmul.f32 %v160, 0.6931472
    %v162 = vsub.f32 %v140, %v159
    %v163 = vsub.f32 %v141, %v159
    %v164 = vsub.f32 %v142, %v161
    %v165 = vsub.f32 %v143, %v161
    %v166 = vpack.c.bf16 %v164, %v162
    %v167 = vpack.c.bf16 %v165, %v163
    %v170 = vunpack.c.l.b16 %v166
    %v171 = vunpack.c.l.b16 %v167
    %v172 = vunpack.c.h.b16 %v166
    %v173 = vunpack.c.h.b16 %v167
    %v174 = vpack.c.b16 %v171, %v170
    %v175 = vpack.c.b16 %v173, %v172
    %178 = vst [vmem:[#allocation7] sm:$0xff] %v174
    %179 = vst [vmem:[#allocation7 + $0x8] sm:$0xff] %v175
    // Predicated region
    $region22: #{tpu_custom_call.1} parent=1 // pred_check
      _
    $region23: #{tpu_custom_call.1} parent=1 // pred_check_branch
      %181 = sbr.rel (0) target = $region25
    $region24: #{tpu_custom_call.1} parent=1 // pred_region
      %s183 = ssub.s32 256, 256
      %184 = vsyncadd [#allocation4], %s183
      %s185 = sshll.u32 [#allocation7], 4
      %s186 = int_to_ptr.vmem [resolvable:$true] %s185
      %191 = dma.vmem_to_hbm [thread:$0]  %s186, 256, %s3, [#allocation4], 128, 128, 8
    $region25: #{tpu_custom_call.1} parent=1 // pred_fallthru
      _
    // Predicated region
    $region26: #{tpu_custom_call.1} parent=1 // pred_check
      _
    $region27: #{tpu_custom_call.1} parent=1 // pred_check_branch
      %193 = sbr.rel (0) target = $region29
    $region28: #{tpu_custom_call.1} parent=1 // pred_region
      %194 = dma.done [#allocation4], 256
    $region29: #{tpu_custom_call.1} parent=1 // pred_fallthru
      _
    %195 = vsyncpa [#allocation3], 1
    %196 = vsyncpa [#allocation6], 1
    %197 = vsyncpa [#allocation4], 1

</llo_original>
